<compile_context>
chip_gen: v7x
topology: tpu7x:2x2x1
jax: 0.10.0
libtpu: 0.0.40
codegen_flags: <defaults>
</compile_context>

<pallas_src>
import math

import jax
import jax.numpy as jnp
from jax.experimental import pallas as pl
from jax.experimental.pallas import tpu as pltpu


# ---------------------------------------------------------------------------
# Glue: positional-encoding tables (small O(L*D/2) work, plain JAX, f32).
# Faithfully reproduces XPOS.__init__ buffer + forward() table construction.
# ---------------------------------------------------------------------------
def _xpos_tables(length, dim, offset=0, downscale=False, scale_base=512):
    half = dim // 2
    # register_buffer('scale', (arange(0, d, 2) + 0.4 d) / (1.4 d))
    base_scale = (jnp.arange(0, dim, 2, dtype=jnp.float32) + 0.4 * dim) / (1.4 * dim)

    max_pos = length + offset
    positions = jnp.arange(0, max_pos, dtype=jnp.float32)            # (max_pos,)
    power = positions / float(scale_base)                            # (max_pos,)
    scale = base_scale[None, :] ** power[:, None]                    # (max_pos, d/2)

    # fixed_pos_embedding(scale): seq_len = max_pos, dim = d/2
    inv_freq = 1.0 / (10000.0 ** (jnp.arange(0, half, dtype=jnp.float32) / half))
    sinusoid = positions[:, None] * inv_freq[None, :]                 # (max_pos, d/2)
    sin = jnp.sin(sinusoid)
    cos = jnp.cos(sinusoid)

    if max_pos > length:            # keep last `length` rows
        scale = scale[-length:]
        sin = sin[-length:]
        cos = cos[-length:]
    if downscale:
        scale = 1.0 / scale

    # duplicate_interleave(t * scale): [a, b, ...] -> [a, a, b, b, ...]
    sin_d = jnp.repeat(sin * scale, 2, axis=-1)                       # (L, D)
    cos_d = jnp.repeat(cos * scale, 2, axis=-1)                       # (L, D)
    return sin_d.astype(jnp.float32), cos_d.astype(jnp.float32)


# ---------------------------------------------------------------------------
# Pallas kernel: out = x * cos + rotate_every_two(x) * sin
#   sin arrives with the +/-1 rotate sign already folded in, so the kernel
#   only needs the pair-swap: two lane rolls (XLU) + a parity select (VPU).
# ---------------------------------------------------------------------------
def _xpos_kernel(x_ref, cos_ref, sin_ref, o_ref):
    x = x_ref[...]                               # (B, TL, D2)
    c = cos_ref[...][None, :, :]                 # (1, TL, D2)  scaled, interleaved
    s = sin_ref[...][None, :, :]                 # (1, TL, D2)  sign-folded

    d2 = x.shape[-1]
    # lane-parity mask, broadcast over batch/sublane dims inside jnp.where
    lane = jax.lax.broadcasted_iota(jnp.int32, (1, 1, d2), dimension=2)
    even = (lane & 1) == 0
    # pair-swap: even lanes take the value from lane+1, odd lanes from lane-1
    from_next = pltpu.roll(x, shift=d2 - 1, axis=x.ndim - 1)   # out[i] = x[i+1]
    from_prev = pltpu.roll(x, shift=1, axis=x.ndim - 1)        # out[i] = x[i-1]
    swapped = jnp.where(even, from_next, from_prev)

    o_ref[...] = (x * c + swapped * s).astype(o_ref.dtype)


def _pick_fold(D, L):
    """Largest fold factor k (dividing L) so that D*k is a multiple of 128
    when possible; pairs stay adjacent for any k."""
    if D % 128 == 0:
        return 1
    kc = 128 // math.gcd(D, 128)
    k = kc
    while k > 1 and L % k != 0:
        k //= 2 if k % 2 == 0 else k  # fall back through divisors of kc
    return k if L % k == 0 else 1


def _pick_seq_tile(L2, per_row_bytes, budget_bytes=24 << 20):
    """Largest tile (multiple of 8, dividing L2) whose double-buffered VMEM
    footprint fits the budget; prefers >=2 grid steps; falls back to L2."""
    target_rows = max(1, (budget_bytes // 2) // max(per_row_bytes, 1))
    candidates = [d for d in range(8, L2 + 1, 8) if L2 % d == 0]
    fitting = [d for d in candidates if d <= target_rows]
    if fitting:
        tile = max(fitting)
    elif candidates:
        tile = min(candidates)          # smallest legal tile (rare; may exceed budget)
    else:
        return L2                       # no multiple-of-8 divisor: full extent
    if tile == L2:                      # keep >=2 grid steps for v7x dual-TC
        halves = [d for d in fitting if d <= L2 // 2]
        if halves:
            tile = max(halves)
    return tile


def xpos_forward(x, offset=0, downscale=False, scale_base=512):
    """XPOS.forward: (B, L, D) -> (B, L, D)."""
    B, L, D = x.shape
    assert D % 2 == 0, "feature dim must be even"

    compute_dtype = jnp.bfloat16 if x.dtype == jnp.bfloat16 else jnp.float32
    sin_d, cos_d = _xpos_tables(L, D, offset, downscale, scale_base)
    # fold rotate_every_two's sign pattern (-1 on even lanes, +1 on odd) into sin
    sign = jnp.where(jnp.arange(D) % 2 == 0, -1.0, 1.0).astype(jnp.float32)
    sin_signed = (sin_d * sign).astype(compute_dtype)
    cos_d = cos_d.astype(compute_dtype)

    # lane-dense packing: fold k sequence rows into the feature axis so the
    # kernel's last dim is a multiple of 128 (pairs stay adjacent -> rotate OK)
    k = _pick_fold(D, L)
    L2, D2 = L // k, D * k
    x2 = x.reshape(B, L2, D2)
    cos2 = cos_d.reshape(L2, D2)
    sin2 = sin_signed.reshape(L2, D2)

    x_item = jnp.dtype(x.dtype).itemsize
    t_item = jnp.dtype(compute_dtype).itemsize
    per_row = 2 * B * D2 * x_item + 2 * D2 * t_item       # x + out + cos + sin
    seq_tile = _pick_seq_tile(L2, per_row)
    est_vmem = 2 * seq_tile * per_row                     # double-buffered estimate
    vmem_limit = int(min(max(32 << 20, est_vmem + (4 << 20)), 100 << 20))

    out2 = pl.pallas_call(
        _xpos_kernel,
        out_shape=jax.ShapeDtypeStruct((B, L2, D2), x.dtype),
        grid_spec=pltpu.PrefetchScalarGridSpec(
            num_scalar_prefetch=0,
            grid=(L2 // seq_tile,),
            in_specs=[
                pl.BlockSpec((B, seq_tile, D2), lambda i: (0, i, 0)),  # x
                pl.BlockSpec((seq_tile, D2), lambda i: (i, 0)),        # cos
                pl.BlockSpec((seq_tile, D2), lambda i: (i, 0)),        # sin (signed)
            ],
            out_specs=pl.BlockSpec((B, seq_tile, D2), lambda i: (0, i, 0)),
        ),
        compiler_params=pltpu.CompilerParams(
            dimension_semantics=("parallel",),
            vmem_limit_bytes=vmem_limit,
        ),
    )(x2, cos2, sin2)
    return out2.reshape(B, L, D)


# ---------------------------------------------------------------------------
# Pure-JAX reference (mirrors the PyTorch code) for verification.
# ---------------------------------------------------------------------------
def xpos_reference(x, offset=0, downscale=False, scale_base=512):
    B, L, D = x.shape
    sin_d, cos_d = _xpos_tables(L, D, offset, downscale, scale_base)
    x1 = x[:, :, 0::2]
    x2 = x[:, :, 1::2]
    rot = jnp.stack((-x2, x1), axis=-1).reshape(B, L, D)
    return (x * cos_d[None] + rot * sin_d[None]).astype(x.dtype)


# TODO(synk): forward_reverse() (negated sin + nn.Dropout at train time) is not
# implemented; only the deterministic forward() path is reproduced here.

if __name__ == "__main__":
    key = jax.random.PRNGKey(0)
    B, L, D = 2, 16, 32          # (batch, seq_len, dimentions)
    x = jax.random.normal(key, (B, L, D), dtype=jnp.float32)

    out = jax.block_until_ready(xpos_forward(x, offset=0, downscale=False))
    ref = xpos_reference(x, offset=0, downscale=False)
    assert out.shape == x.shape and out.dtype == x.dtype
    assert jnp.allclose(out, ref, atol=1e-5, rtol=1e-5), "mismatch vs reference (fwd)"

    out2 = jax.block_until_ready(xpos_forward(x, offset=4, downscale=True))
    ref2 = xpos_reference(x, offset=4, downscale=True)
    assert jnp.allclose(out2, ref2, atol=1e-5, rtol=1e-5), "mismatch vs reference (offset/downscale)"

    print("KERNEL_OK")
</pallas_src>

<mosaic_0001>
module attributes {stable_mosaic.version = 11 : i64} {
  func.func @_xpos_kernel(%arg0: i32, %arg1: memref<2x4x128xf32, #tpu.memory_space<vmem>>, %arg2: memref<4x128xf32, #tpu.memory_space<vmem>>, %arg3: memref<4x128xf32, #tpu.memory_space<vmem>>, %arg4: memref<2x4x128xf32, #tpu.memory_space<vmem>>) attributes {dimension_semantics = [#tpu.dimension_semantics<parallel>], iteration_bounds = array<i64: 1>, scalar_prefetch = 0 : i64, scratch_operands = 0 : i64, tpu.core_type = #tpu.core_type<tc>, window_params = [{transform_indices = @transform_0, window_bounds = array<i64: 2, 4, 128>}, {transform_indices = @transform_1, window_bounds = array<i64: 4, 128>}, {transform_indices = @transform_2, window_bounds = array<i64: 4, 128>}, {transform_indices = @transform_3, window_bounds = array<i64: 2, 4, 128>}]} {
    %c0 = arith.constant 0 : index
    %c0_0 = arith.constant 0 : index
    %c0_1 = arith.constant 0 : index
    %0 = vector.load %arg1[%c0, %c0_0, %c0_1] : memref<2x4x128xf32, #tpu.memory_space<vmem>>, vector<2x4x128xf32>
    %c0_2 = arith.constant 0 : index
    %c0_3 = arith.constant 0 : index
    %1 = vector.load %arg2[%c0_2, %c0_3] : memref<4x128xf32, #tpu.memory_space<vmem>>, vector<4x128xf32>
    %2 = vector.shape_cast %1 : vector<4x128xf32> to vector<1x4x128xf32>
    %c0_4 = arith.constant 0 : index
    %c0_5 = arith.constant 0 : index
    %3 = vector.load %arg3[%c0_4, %c0_5] : memref<4x128xf32, #tpu.memory_space<vmem>>, vector<4x128xf32>
    %4 = vector.shape_cast %3 : vector<4x128xf32> to vector<1x4x128xf32>
    %5 = tpu.iota {dimensions = array<i32: 2>} : vector<1x1x128xi32>
    %c1_i32 = arith.constant 1 : i32
    %6 = vector.broadcast %c1_i32 : i32 to vector<1x1x128xi32>
    %7 = arith.andi %5, %6 : vector<1x1x128xi32>
    %c0_i32 = arith.constant 0 : i32
    %8 = vector.broadcast %c0_i32 : i32 to vector<1x1x128xi32>
    %9 = arith.cmpi eq, %7, %8 : vector<1x1x128xi32>
    %c127_i32 = arith.constant 127 : i32
    %10 = tpu.dynamic_rotate %0 by %c127_i32 dim 2 : vector<2x4x128xf32>, i32 -> vector<2x4x128xf32>
    %c1_i32_6 = arith.constant 1 : i32
    %11 = tpu.dynamic_rotate %0 by %c1_i32_6 dim 2 : vector<2x4x128xf32>, i32 -> vector<2x4x128xf32>
    %12 = vector.shape_cast %9 : vector<1x1x128xi1> to vector<1x1x128xi1>
    %13 = vector.broadcast %12 : vector<1x1x128xi1> to vector<2x4x128xi1>
    %14 = arith.select %13, %10, %11 : vector<2x4x128xi1>, vector<2x4x128xf32>
    %15 = vector.broadcast %2 : vector<1x4x128xf32> to vector<2x4x128xf32>
    %16 = arith.mulf %0, %15 : vector<2x4x128xf32>
    %17 = vector.broadcast %4 : vector<1x4x128xf32> to vector<2x4x128xf32>
    %18 = arith.mulf %14, %17 : vector<2x4x128xf32>
    %19 = arith.addf %16, %18 : vector<2x4x128xf32>
    %c0_7 = arith.constant 0 : index
    %c0_8 = arith.constant 0 : index
    %c0_9 = arith.constant 0 : index
    %20 = vector.load %arg4[%c0_7, %c0_8, %c0_9] : memref<2x4x128xf32, #tpu.memory_space<vmem>>, vector<2x4x128xf32>
    tpu.vector_store %arg4[%c0_7, %c0_8, %c0_9], %19 {strides = array<i32>} : memref<2x4x128xf32, #tpu.memory_space<vmem>>, vector<2x4x128xf32>,
    return
  }
  func.func @transform_0(%arg0: i32) -> (i32, i32, i32) {
    %c0_i32 = arith.constant 0 : i32
    %c0_i32_0 = arith.constant 0 : i32
    %c0_i32_1 = arith.constant 0 : i32
    return %c0_i32, %arg0, %c0_i32_0 : i32, i32, i32
  }
  func.func @transform_1(%arg0: i32) -> (i32, i32) {
    %c0_i32 = arith.constant 0 : i32
    %c0_i32_0 = arith.constant 0 : i32
    return %arg0, %c0_i32 : i32, i32
  }
  func.func @transform_2(%arg0: i32) -> (i32, i32) {
    %c0_i32 = arith.constant 0 : i32
    %c0_i32_0 = arith.constant 0 : i32
    return %arg0, %c0_i32 : i32, i32
  }
  func.func @transform_3(%arg0: i32) -> (i32, i32, i32) {
    %c0_i32 = arith.constant 0 : i32
    %c0_i32_0 = arith.constant 0 : i32
    %c0_i32_1 = arith.constant 0 : i32
    return %c0_i32, %arg0, %c0_i32_0 : i32, i32, i32
  }
}

</mosaic_0001>

<llo_original>
// kernel: tpu_custom_call.1
$region0: #{tpu_custom_call.1}
  #allocation0 [shape = 'u32[]', space=smem, size = 0x4, offset = 0x4, fixed_abs, tag = 'smem constant byte address 0x4 - core index']
  #allocation1 [shape = 'u32[144,128]{1,0:T(1,128)}', space=vmem, size = 0x12000, scoped, tag = 'internal scratch']
  %s0 = inlined_call_operand.hbm [shape: f32[2,4,128], index: 0, kind: input, shape index: {}]
  %s1 = inlined_call_operand.hbm [shape: f32[4,128], index: 1, kind: input, shape index: {}]
  %s2 = inlined_call_operand.vmem [shape: f32[4,128], index: 2, kind: input, shape index: {}]
  %s3 = inlined_call_operand.hbm [shape: f32[2,4,128], index: 3, kind: output, shape index: {}]
  %s4 = sld [smem:[#allocation0]]
  $region30: #{tpu_custom_call.1} parent=0
    _
  %s6 = ssub.s32 1, %s4
  %s7 = scalar_select 0, %s6, %s4
  $region1: #{tpu_custom_call.1} parent=0
    #allocation2 [shape = 'u8[4096]{0}', space=vmem, size = 0x1000, scoped, tag = 'input window, operand 0, single buffered']
    #allocation3 [shape = 's32[1]{0}', space=sflag, size = 0x4, scoped, tag = 'scoped memory for tpu_custom_call.1']
    #allocation4 [shape = 's32[1]{0}', space=sflag, size = 0x4, scoped, tag = 'scoped memory for tpu_custom_call.1']
    #allocation5 [shape = 'u8[2048]{0}', space=vmem, size = 0x800, scoped, tag = 'input window, operand 1, single buffered']
    #allocation6 [shape = 's32[1]{0}', space=sflag, size = 0x4, scoped, tag = 'scoped memory for tpu_custom_call.1']
    #allocation7 [shape = 'u8[4096]{0}', space=vmem, size = 0x1000, scoped, tag = 'output window, operand 0, single buffered']
    %8 = vsyncpa [#allocation3], 0
    %9 = vsyncpa [#allocation6], 0
    %10 = vsyncpa [#allocation4], 0
    // Predicated region
    $region2: #{tpu_custom_call.1} parent=1 // pred_check
      _
    $region3: #{tpu_custom_call.1} parent=1 // pred_check_branch
      %12 = sbr.rel (0) target = $region5
    $region4: #{tpu_custom_call.1} parent=1 // pred_region
      %s14 = ssub.s32 128, 128
      %15 = vsyncadd [#allocation3], %s14
      %s16 = sshll.u32 [#allocation2], 4
      %s17 = int_to_ptr.vmem [resolvable:$true] %s16
      %22 = dma.hbm_to_vmem [thread:$0]  %s0, 128, %s17, [#allocation3], 64, 64, 4
    $region5: #{tpu_custom_call.1} parent=1 // pred_fallthru
      _
    // Predicated region
    $region6: #{tpu_custom_call.1} parent=1 // pred_check
      _
    $region7: #{tpu_custom_call.1} parent=1 // pred_check_branch
      %24 = sbr.rel (0) target = $region9
    $region8: #{tpu_custom_call.1} parent=1 // pred_region
      %s26 = ssub.s32 64, 64
      %27 = vsyncadd [#allocation6], %s26
      %s29 = sshll.u32 [#allocation5], 4
      %s30 = int_to_ptr.vmem [resolvable:$true] %s29
      %32 = dma.hbm_to_vmem [thread:$0]  %s1, 64, %s30, [#allocation6]
    $region9: #{tpu_custom_call.1} parent=1 // pred_fallthru
      _
    // Predicated region
    $region10: #{tpu_custom_call.1} parent=1 // pred_check
      _
    $region11: #{tpu_custom_call.1} parent=1 // pred_check_branch
      %34 = sbr.rel (0) target = $region13
    $region12: #{tpu_custom_call.1} parent=1 // pred_region
      _
    $region13: #{tpu_custom_call.1} parent=1 // pred_fallthru
      _
    // Predicated region
    $region14: #{tpu_custom_call.1} parent=1 // pred_check
      _
    $region15: #{tpu_custom_call.1} parent=1 // pred_check_branch
      %36 = sbr.rel (0) target = $region17
    $region16: #{tpu_custom_call.1} parent=1 // pred_region
      %37 = dma.done [#allocation3], 128
    $region17: #{tpu_custom_call.1} parent=1 // pred_fallthru
      _
    // Predicated region
    $region18: #{tpu_custom_call.1} parent=1 // pred_check
      _
    $region19: #{tpu_custom_call.1} parent=1 // pred_check_branch
      %39 = sbr.rel (0) target = $region21
    $region20: #{tpu_custom_call.1} parent=1 // pred_region
      %40 = dma.done [#allocation6], 64
    $region21: #{tpu_custom_call.1} parent=1 // pred_fallthru
      _
    %v41 = vld [vmem:[#allocation2] sm:$0xf]
    %v42 = vld [vmem:[#allocation2 + $0x4] sm:$0xf]
    %v43 = vld [vmem:[#allocation5] sm:$0xf]
    %v44 = vld [vmem:[%s2] sm:$0xf]
    %v45 = vlaneseq
    %v46 = vand.u32 %v45, 127
    %v47 = vand.u32 %v46, 1
    %vm48 = vcmp.eq.s32.totalorder %v47, 0
    %49 = vrot.lane.b32.xlu0 %v41, 127
    %v50 = vpop.permute.xlu0 %49
    %51 = vrot.lane.b32.xlu0 %v42, 127
    %v52 = vpop.permute.xlu0 %51
    %53 = vrot.lane.b32.xlu0 %v41, 1
    %v54 = vpop.permute.xlu0 %53
    %55 = vrot.lane.b32.xlu0 %v42, 1
    %v56 = vpop.permute.xlu0 %55
    %v57 = vsel %vm48, 1, 0
    %vm58 = vcmp.eq.s32.totalorder %v57, 1
    %v59 = vsel %vm58, %v50, %v54
    %v60 = vsel %vm58, %v52, %v56
    %v61 = vmul.f32 %v41, %v43
    %v62 = vmul.f32 %v42, %v43
    %v63 = vmul.f32 %v59, %v44
    %v64 = vmul.f32 %v60, %v44
    %v65 = vadd.f32 %v61, %v63
    %v66 = vadd.f32 %v62, %v64
    %67 = vst [vmem:[#allocation7] sm:$0xf] %v65
    %68 = vst [vmem:[#allocation7 + $0x4] sm:$0xf] %v66
    // Predicated region
    $region22: #{tpu_custom_call.1} parent=1 // pred_check
      _
    $region23: #{tpu_custom_call.1} parent=1 // pred_check_branch
      %70 = sbr.rel (0) target = $region25
    $region24: #{tpu_custom_call.1} parent=1 // pred_region
      %s72 = ssub.s32 128, 128
      %73 = vsyncadd [#allocation4], %s72
      %s74 = sshll.u32 [#allocation7], 4
      %s75 = int_to_ptr.vmem [resolvable:$true] %s74
      %80 = dma.vmem_to_hbm [thread:$0]  %s75, 128, %s3, [#allocation4], 64, 64, 4
    $region25: #{tpu_custom_call.1} parent=1 // pred_fallthru
      _
    // Predicated region
    $region26: #{tpu_custom_call.1} parent=1 // pred_check
      _
    $region27: #{tpu_custom_call.1} parent=1 // pred_check_branch
      %82 = sbr.rel (0) target = $region29
    $region28: #{tpu_custom_call.1} parent=1 // pred_region
      %83 = dma.done [#allocation4], 128
    $region29: #{tpu_custom_call.1} parent=1 // pred_fallthru
      _
    %84 = vsyncpa [#allocation3], 1
    %85 = vsyncpa [#allocation6], 1
    %86 = vsyncpa [#allocation4], 1

</llo_original>
